<compile_context>
chip_gen: v6e
topology: v6e:2x2x1
jax: 0.10.0
libtpu: 0.0.40
codegen_flags: <defaults>
</compile_context>

<pallas_src>
from functools import partial

import jax
import jax.numpy as jnp
from jax.experimental import pallas as pl
from jax.experimental.pallas import tpu as pltpu

NEG_INF = -1e9
LN_EPS = 1e-5


# ----------------------------------------------------------------------------
# In-kernel helpers (pure jnp, traced inside the Pallas kernel bodies)
# ----------------------------------------------------------------------------
def _mm(x, w, b=None):
    """bf16 MXU matmul with f32 accumulation; optional f32 bias add."""
    y = jnp.dot(x.astype(jnp.bfloat16), w.astype(jnp.bfloat16),
                preferred_element_type=jnp.float32)
    if b is not None:
        y = y + b
    return y


def _ln(x, g, b, eps=LN_EPS):
    mean = jnp.mean(x, axis=-1, keepdims=True)
    var = jnp.mean((x - mean) ** 2, axis=-1, keepdims=True)
    return (x - mean) * jax.lax.rsqrt(var + eps) * g + b


def _attend(q, k, v, num_heads, mask=None):
    """q: [Lq, E], k/v: [Lk, E] f32. Heads live in static lane slices."""
    Lq, E = q.shape
    Dh = E // num_heads
    scale = 1.0 / float(Dh) ** 0.5
    outs = []
    for h in range(num_heads):
        sl = slice(h * Dh, (h + 1) * Dh)
        qh = (q[:, sl] * scale).astype(jnp.bfloat16)
        kh = k[:, sl].astype(jnp.bfloat16)
        vh = v[:, sl].astype(jnp.bfloat16)
        s = jax.lax.dot_general(qh, kh, (((1,), (1,)), ((), ())),
                                preferred_element_type=jnp.float32)
        if mask is not None:
            s = s + mask
        s = s - jnp.max(s, axis=-1, keepdims=True)
        p = jnp.exp(s)
        p = p * pl.reciprocal(jnp.sum(p, axis=-1, keepdims=True), approx=True)
        outs.append(jnp.dot(p.astype(jnp.bfloat16), vh,
                            preferred_element_type=jnp.float32))
    return jnp.concatenate(outs, axis=-1)


def _causal_pad_mask(n, valid_len):
    """Additive f32 mask [n, n]: causal + key-padding (keys >= valid_len)."""
    row = jax.lax.broadcasted_iota(jnp.int32, (n, n), 0)
    col = jax.lax.broadcasted_iota(jnp.int32, (n, n), 1)
    ok = (col <= row) & (col < valid_len)
    return jnp.where(ok, 0.0, NEG_INF)


# ----------------------------------------------------------------------------
# Pallas kernels
# ----------------------------------------------------------------------------
def _embed_kernel(x_ref, w_ref, b_ref, pos_ref, o_ref):
    # input projection of patches + positional embedding add, fused
    o_ref[...] = _mm(x_ref[...], w_ref[...], b_ref[...]) + pos_ref[...]


def _layernorm_kernel(x_ref, g_ref, b_ref, o_ref):
    o_ref[...] = _ln(x_ref[...], g_ref[...], b_ref[...])


def _encoder_layer_kernel(x_ref, wqkv_ref, bqkv_ref, wo_ref, bo_ref,
                          ln1g_ref, ln1b_ref,
                          w1_ref, b1_ref, w2_ref, b2_ref,
                          ln2g_ref, ln2b_ref, o_ref, *, num_heads):
    x = x_ref[0]                                   # [T, E] f32
    E = x.shape[-1]
    # fused QKV projection, self-attention (no mask), output projection
    qkv = _mm(x, wqkv_ref[...], bqkv_ref[...])     # [T, 3E]
    attn = _attend(qkv[:, :E], qkv[:, E:2 * E], qkv[:, 2 * E:], num_heads)
    attn = _mm(attn, wo_ref[...], bo_ref[...])
    h1 = _ln(x + attn, ln1g_ref[...], ln1b_ref[...])
    # fused FFN (relu) + residual + LN
    ff = jnp.maximum(_mm(h1, w1_ref[...], b1_ref[...]), 0.0)
    ff = _mm(ff, w2_ref[...], b2_ref[...])
    o_ref[0] = _ln(h1 + ff, ln2g_ref[...], ln2b_ref[...])


def _decoder_layer_kernel(y_ref, mem_ref,
                          swqkv_ref, sbqkv_ref, swo_ref, sbo_ref,
                          ln1g_ref, ln1b_ref,
                          cwq_ref, cbq_ref, cwkv_ref, cbkv_ref,
                          cwo_ref, cbo_ref,
                          ln2g_ref, ln2b_ref,
                          w1_ref, b1_ref, w2_ref, b2_ref,
                          ln3g_ref, ln3b_ref, o_ref,
                          *, num_heads, tgt_valid_len):
    y = y_ref[0]                                   # [N, E]
    mem = mem_ref[0]                               # [T, E]
    E = y.shape[-1]
    N = y.shape[0]

    # masked self-attention (mask built in-kernel; zero HBM traffic for it)
    mask = _causal_pad_mask(N, tgt_valid_len)
    qkv = _mm(y, swqkv_ref[...], sbqkv_ref[...])
    sa = _attend(qkv[:, :E], qkv[:, E:2 * E], qkv[:, 2 * E:],
                 num_heads, mask=mask)
    sa = _mm(sa, swo_ref[...], sbo_ref[...])
    h1 = _ln(y + sa, ln1g_ref[...], ln1b_ref[...])

    # cross-attention (no mask -> skipped entirely); K/V fused into one matmul
    q = _mm(h1, cwq_ref[...], cbq_ref[...])
    kv = _mm(mem, cwkv_ref[...], cbkv_ref[...])
    ca = _attend(q, kv[:, :E], kv[:, E:], num_heads)
    ca = _mm(ca, cwo_ref[...], cbo_ref[...])
    h2 = _ln(h1 + ca, ln2g_ref[...], ln2b_ref[...])

    # FFN + residual + LN
    ff = jnp.maximum(_mm(h2, w1_ref[...], b1_ref[...]), 0.0)
    ff = _mm(ff, w2_ref[...], b2_ref[...])
    o_ref[0] = _ln(h2 + ff, ln3g_ref[...], ln3b_ref[...])


def _head_kernel(x_ref, dg_ref, db_ref, hg_ref, hb_ref, w_ref, b_ref, o_ref):
    # decoder final norm + head LayerNorm + head Linear, fused
    x = _ln(x_ref[...], dg_ref[...], db_ref[...])
    x = _ln(x, hg_ref[...], hb_ref[...])
    o_ref[...] = _mm(x, w_ref[...], b_ref[...])


# ----------------------------------------------------------------------------
# pallas_call wrappers
# ----------------------------------------------------------------------------
def _full2(shape):
    return pl.BlockSpec(shape, lambda i: (0, 0))


def embed_pallas(x, w, b, pos):
    R, K = x.shape
    E = w.shape[1]
    return pl.pallas_call(
        _embed_kernel,
        grid=(1,),
        in_specs=[_full2((R, K)), _full2((K, E)), _full2((1, E)), _full2((R, E))],
        out_specs=_full2((R, E)),
        out_shape=jax.ShapeDtypeStruct((R, E), jnp.float32),
    )(x, w, b, pos)


def layer_norm_pallas(x, g, b):
    R, E = x.shape
    return pl.pallas_call(
        _layernorm_kernel,
        grid=(1,),
        in_specs=[_full2((R, E)), _full2((1, E)), _full2((1, E))],
        out_specs=_full2((R, E)),
        out_shape=jax.ShapeDtypeStruct((R, E), jnp.float32),
    )(x, g, b)


def encoder_layer_pallas(x, p, num_heads):
    B, T, E = x.shape
    Hd = p["w1"].shape[1]
    return pl.pallas_call(
        partial(_encoder_layer_kernel, num_heads=num_heads),
        grid=(B,),
        in_specs=[
            pl.BlockSpec((1, T, E), lambda i: (i, 0, 0)),
            _full2((E, 3 * E)), _full2((1, 3 * E)),
            _full2((E, E)), _full2((1, E)),
            _full2((1, E)), _full2((1, E)),
            _full2((E, Hd)), _full2((1, Hd)),
            _full2((Hd, E)), _full2((1, E)),
            _full2((1, E)), _full2((1, E)),
        ],
        out_specs=pl.BlockSpec((1, T, E), lambda i: (i, 0, 0)),
        out_shape=jax.ShapeDtypeStruct((B, T, E), jnp.float32),
        compiler_params=pltpu.CompilerParams(dimension_semantics=("parallel",)),
    )(x, p["wqkv"], p["bqkv"], p["wo"], p["bo"], p["ln1_g"], p["ln1_b"],
      p["w1"], p["b1"], p["w2"], p["b2"], p["ln2_g"], p["ln2_b"])


def decoder_layer_pallas(y, mem, p, num_heads, tgt_valid_len):
    B, N, E = y.shape
    T = mem.shape[1]
    Hd = p["w1"].shape[1]
    return pl.pallas_call(
        partial(_decoder_layer_kernel, num_heads=num_heads,
                tgt_valid_len=tgt_valid_len),
        grid=(B,),
        in_specs=[
            pl.BlockSpec((1, N, E), lambda i: (i, 0, 0)),
            pl.BlockSpec((1, T, E), lambda i: (i, 0, 0)),
            _full2((E, 3 * E)), _full2((1, 3 * E)),
            _full2((E, E)), _full2((1, E)),
            _full2((1, E)), _full2((1, E)),
            _full2((E, E)), _full2((1, E)),
            _full2((E, 2 * E)), _full2((1, 2 * E)),
            _full2((E, E)), _full2((1, E)),
            _full2((1, E)), _full2((1, E)),
            _full2((E, Hd)), _full2((1, Hd)),
            _full2((Hd, E)), _full2((1, E)),
            _full2((1, E)), _full2((1, E)),
        ],
        out_specs=pl.BlockSpec((1, N, E), lambda i: (i, 0, 0)),
        out_shape=jax.ShapeDtypeStruct((B, N, E), jnp.float32),
        compiler_params=pltpu.CompilerParams(dimension_semantics=("parallel",)),
    )(y, mem,
      p["s_wqkv"], p["s_bqkv"], p["s_wo"], p["s_bo"], p["ln1_g"], p["ln1_b"],
      p["c_wq"], p["c_bq"], p["c_wkv"], p["c_bkv"], p["c_wo"], p["c_bo"],
      p["ln2_g"], p["ln2_b"],
      p["w1"], p["b1"], p["w2"], p["b2"], p["ln3_g"], p["ln3_b"])


def head_pallas(x, dg, db, hg, hb, w, b):
    R, E = x.shape
    nc = w.shape[1]
    return pl.pallas_call(
        _head_kernel,
        grid=(1,),
        in_specs=[
            _full2((R, E)),
            _full2((1, E)), _full2((1, E)),
            _full2((1, E)), _full2((1, E)),
            _full2((E, nc)), _full2((1, nc)),
        ],
        out_specs=_full2((R, nc)),
        out_shape=jax.ShapeDtypeStruct((R, nc), jnp.float32),
    )(x, dg, db, hg, hb, w, b)


# ----------------------------------------------------------------------------
# Model glue (patchify, embedding gather, layer stacking)
# ----------------------------------------------------------------------------
def img_to_patch(x, patch_size):
    B, C, H, W = x.shape
    P = patch_size
    Hp, Wp = H // P, W // P
    x = x.reshape(B, C, Hp, P, Wp, P)
    x = x.transpose(0, 2, 4, 1, 3, 5)              # [B, Hp, Wp, C, P, P]
    x = x.reshape(B, Hp * Wp, C * P * P)
    return x.astype(jnp.float32)


def dsi_vit_forward(params, imgs, ids, cfg):
    E = cfg["embed_dim"]
    nh = cfg["num_heads"]
    B = imgs.shape[0]

    # patchify + fused (input projection + positional embedding) kernel
    patches = img_to_patch(imgs, cfg["patch_size"])            # [B, T, C*P*P]
    T, V = patches.shape[1], patches.shape[2]
    pos = params["pos_embedding"]                              # [1, L, E] f32
    pos_src = jnp.broadcast_to(pos[:, :T], (B, T, E)).reshape(B * T, E)
    src = embed_pallas(patches.reshape(B * T, V), params["input_w"],
                       params["input_b"], pos_src).reshape(B, T, E)

    # id embedding (padding_idx row is zero) + "-1 mask token" rows to length N
    M = ids.shape[1]
    N = cfg["img_id_max_length"] + 2
    ids_emb = jnp.take(params["id_embedding"], ids, axis=0)    # [B, M, E]
    if M < N:
        mask_rows = jnp.full((B, N - M, E), -1.0, dtype=jnp.float32)
        tgt = jnp.concatenate([ids_emb, mask_rows], axis=1)
    elif M > N:
        tgt = ids_emb[:, :N]
    else:
        tgt = ids_emb
    tgt = (tgt + pos[:, :N]).astype(jnp.float32)
    tgt_valid_len = min(M, N)   # static: key-padding starts here

    # encoder stack (1 fused kernel per layer) + final encoder norm
    mem = src
    for lp in params["encoder_layers"]:
        mem = encoder_layer_pallas(mem, lp, nh)
    mem = layer_norm_pallas(mem.reshape(B * T, E),
                            params["enc_norm_g"],
                            params["enc_norm_b"]).reshape(B, T, E)

    # decoder stack (1 fused kernel per layer; mask built in-kernel)
    y = tgt
    for lp in params["decoder_layers"]:
        y = decoder_layer_pallas(y, mem, lp, nh, tgt_valid_len)

    # last target position -> fused (decoder norm + head LN + head Linear)
    y_last = y[:, -1, :]                                        # [B, E]
    out = head_pallas(y_last,
                      params["dec_norm_g"], params["dec_norm_b"],
                      params["head_ln_g"], params["head_ln_b"],
                      params["head_w"], params["head_b"])       # [B, num_classes]
    return out


# ----------------------------------------------------------------------------
# Deterministic parameter initialization (shapes follow DSI_ViT.__init__,
# QKV / KV weights pre-fused, biases & LN params pre-reshaped to (1, N),
# matmul weights stored in bf16)
# ----------------------------------------------------------------------------
def init_params(key, cfg):
    E, Hd = cfg["embed_dim"], cfg["hidden_dim"]
    C, P, nc = cfg["num_channels"], cfg["patch_size"], cfg["num_classes"]
    pos_len = cfg["num_patches"] + cfg["img_id_max_length"] + 2
    keys = iter(jax.random.split(key, 512))

    def w(shape, scale=0.02, dtype=jnp.bfloat16):
        return (scale * jax.random.normal(next(keys), shape)).astype(dtype)

    def zeros(shape):
        return jnp.zeros(shape, jnp.float32)

    def ones(shape):
        return jnp.ones(shape, jnp.float32)

    def enc_layer():
        return dict(
            wqkv=w((E, 3 * E)), bqkv=zeros((1, 3 * E)),
            wo=w((E, E)), bo=zeros((1, E)),
            ln1_g=ones((1, E)), ln1_b=zeros((1, E)),
            w1=w((E, Hd)), b1=zeros((1, Hd)),
            w2=w((Hd, E)), b2=zeros((1, E)),
            ln2_g=ones((1, E)), ln2_b=zeros((1, E)),
        )

    def dec_layer():
        return dict(
            s_wqkv=w((E, 3 * E)), s_bqkv=zeros((1, 3 * E)),
            s_wo=w((E, E)), s_bo=zeros((1, E)),
            ln1_g=ones((1, E)), ln1_b=zeros((1, E)),
            c_wq=w((E, E)), c_bq=zeros((1, E)),
            c_wkv=w((E, 2 * E)), c_bkv=zeros((1, 2 * E)),
            c_wo=w((E, E)), c_bo=zeros((1, E)),
            ln2_g=ones((1, E)), ln2_b=zeros((1, E)),
            w1=w((E, Hd)), b1=zeros((1, Hd)),
            w2=w((Hd, E)), b2=zeros((1, E)),
            ln3_g=ones((1, E)), ln3_b=zeros((1, E)),
        )

    id_emb = w((nc, E), 1.0, jnp.float32)
    id_emb = id_emb.at[cfg["img_id_padding_token"]].set(0.0)   # padding_idx row

    return dict(
        input_w=w((C * P * P, E)), input_b=zeros((1, E)),
        id_embedding=id_emb,
        pos_embedding=w((1, pos_len, E), 1.0, jnp.float32),
        encoder_layers=[enc_layer() for _ in range(cfg["num_layers"])],
        decoder_layers=[dec_layer() for _ in range(cfg["num_layers"])],
        enc_norm_g=ones((1, E)), enc_norm_b=zeros((1, E)),
        dec_norm_g=ones((1, E)), dec_norm_b=zeros((1, E)),
        head_ln_g=ones((1, E)), head_ln_b=zeros((1, E)),
        head_w=w((E, nc)), head_b=zeros((1, nc)),
    )


# ----------------------------------------------------------------------------
if __name__ == "__main__":
    cfg = dict(
        embed_dim=32, hidden_dim=64, num_channels=4, num_heads=4, num_layers=2,
        batch_size=2, num_classes=13, patch_size=8, num_patches=4,
        img_id_max_length=6, img_id_start_token=10, img_id_end_token=11,
        img_id_padding_token=12,
    )
    key = jax.random.PRNGKey(0)
    pkey, ikey = jax.random.split(key)
    params = init_params(pkey, cfg)

    B = 2
    imgs = jax.random.normal(ikey, (B, cfg["num_channels"], 16, 16),
                             dtype=jnp.float32)
    ids = jnp.array([[10, 3, 7], [10, 1, 12]], dtype=jnp.int32)   # [B, M=3]

    out = dsi_vit_forward(params, imgs, ids, cfg)
    out = jax.block_until_ready(out)

    assert out.shape == (B, cfg["num_classes"]), out.shape
    assert bool(jnp.all(jnp.isfinite(out)))
    print("KERNEL_OK")
</pallas_src>

<mosaic_0001>
module attributes {stable_mosaic.version = 11 : i64} {
  func.func @_embed_kernel(%arg0: i32, %arg1: memref<8x256xf32, #tpu.memory_space<vmem>>, %arg2: memref<256x32xbf16, #tpu.memory_space<vmem>>, %arg3: memref<1x32xf32, #tpu.memory_space<vmem>>, %arg4: memref<8x32xf32, #tpu.memory_space<vmem>>, %arg5: memref<8x32xf32, #tpu.memory_space<vmem>>) attributes {dimension_semantics = [#tpu.dimension_semantics<arbitrary>], iteration_bounds = array<i64: 1>, scalar_prefetch = 0 : i64, scratch_operands = 0 : i64, tpu.core_type = #tpu.core_type<tc>, window_params = [{pipeline_mode = #tpu.pipeline_mode<synchronous>, transform_indices = @transform_0, window_bounds = array<i64: 8, 256>}, {pipeline_mode = #tpu.pipeline_mode<synchronous>, transform_indices = @transform_1, window_bounds = array<i64: 256, 32>}, {pipeline_mode = #tpu.pipeline_mode<synchronous>, transform_indices = @transform_2, window_bounds = array<i64: 1, 32>}, {pipeline_mode = #tpu.pipeline_mode<synchronous>, transform_indices = @transform_3, window_bounds = array<i64: 8, 32>}, {pipeline_mode = #tpu.pipeline_mode<synchronous>, transform_indices = @transform_4, window_bounds = array<i64: 8, 32>}]} {
    %c0 = arith.constant 0 : index
    %c0_0 = arith.constant 0 : index
    %0 = vector.load %arg1[%c0, %c0_0] : memref<8x256xf32, #tpu.memory_space<vmem>>, vector<8x256xf32>
    %c0_1 = arith.constant 0 : index
    %c0_2 = arith.constant 0 : index
    %1 = vector.load %arg2[%c0_1, %c0_2] : memref<256x32xbf16, #tpu.memory_space<vmem>>, vector<256x32xbf16>
    %c0_3 = arith.constant 0 : index
    %c0_4 = arith.constant 0 : index
    %2 = vector.load %arg3[%c0_3, %c0_4] : memref<1x32xf32, #tpu.memory_space<vmem>>, vector<1x32xf32>
    %3 = arith.truncf %0 : vector<8x256xf32> to vector<8x256xbf16>
    %cst = arith.constant dense<0.000000e+00> : vector<8x32xf32>
    %4 = tpu.matmul %3, %1, %cst {dimension_numbers = #tpu.dot_dimension_numbers<[1], [0], [0], [1], [0, 0, 1, 1], [], []>} : vector<8x256xbf16>, vector<256x32xbf16>, vector<8x32xf32> -> vector<8x32xf32>
    %5 = vector.broadcast %2 : vector<1x32xf32> to vector<8x32xf32>
    %6 = arith.addf %4, %5 : vector<8x32xf32>
    %c0_5 = arith.constant 0 : index
    %c0_6 = arith.constant 0 : index
    %7 = vector.load %arg4[%c0_5, %c0_6] : memref<8x32xf32, #tpu.memory_space<vmem>>, vector<8x32xf32>
    %8 = arith.addf %6, %7 : vector<8x32xf32>
    %c0_7 = arith.constant 0 : index
    %c0_8 = arith.constant 0 : index
    %9 = vector.load %arg5[%c0_7, %c0_8] : memref<8x32xf32, #tpu.memory_space<vmem>>, vector<8x32xf32>
    tpu.vector_store %arg5[%c0_7, %c0_8], %8 {strides = array<i32>} : memref<8x32xf32, #tpu.memory_space<vmem>>, vector<8x32xf32>,
    return
  }
  func.func @transform_0(%arg0: i32) -> (i32, i32) {
    %c0_i32 = arith.constant 0 : i32
    %c0_i32_0 = arith.constant 0 : i32
    %c0_i32_1 = arith.constant 0 : i32
    return %c0_i32, %c0_i32_0 : i32, i32
  }
  func.func @transform_1(%arg0: i32) -> (i32, i32) {
    %c0_i32 = arith.constant 0 : i32
    %c0_i32_0 = arith.constant 0 : i32
    %c0_i32_1 = arith.constant 0 : i32
    return %c0_i32, %c0_i32_0 : i32, i32
  }
  func.func @transform_2(%arg0: i32) -> (i32, i32) {
    %c0_i32 = arith.constant 0 : i32
    %c0_i32_0 = arith.constant 0 : i32
    %c0_i32_1 = arith.constant 0 : i32
    return %c0_i32, %c0_i32_0 : i32, i32
  }
  func.func @transform_3(%arg0: i32) -> (i32, i32) {
    %c0_i32 = arith.constant 0 : i32
    %c0_i32_0 = arith.constant 0 : i32
    %c0_i32_1 = arith.constant 0 : i32
    return %c0_i32, %c0_i32_0 : i32, i32
  }
  func.func @transform_4(%arg0: i32) -> (i32, i32) {
    %c0_i32 = arith.constant 0 : i32
    %c0_i32_0 = arith.constant 0 : i32
    %c0_i32_1 = arith.constant 0 : i32
    return %c0_i32, %c0_i32_0 : i32, i32
  }
}

</mosaic_0001>

<llo_original>
// kernel: tpu_custom_call.1
$region0: #{tpu_custom_call.1}
  #allocation0 [shape = 'u32[]', space=smem, size = 0x4, offset = 0x4, fixed_abs, tag = 'smem constant byte address 0x4 - core index']
  #allocation1 [shape = 'u32[144,128]{1,0:T(1,128)}', space=vmem, size = 0x12000, scoped, tag = 'internal scratch']
  %s0 = inlined_call_operand.vmem [shape: f32[8,256], index: 0, kind: input, shape index: {}]
  %s1 = inlined_call_operand.vmem [shape: bf16[256,32], index: 1, kind: input, shape index: {}]
  %s2 = inlined_call_operand.vmem [shape: f32[1,32], index: 2, kind: input, shape index: {}]
  %s3 = inlined_call_operand.vmem [shape: f32[8,32], index: 3, kind: input, shape index: {}]
  %s4 = inlined_call_operand.hbm [shape: f32[8,32], index: 4, kind: output, shape index: {}]
  %s5 = sld [smem:[#allocation0]]
  $region26: #{tpu_custom_call.1} parent=0
    _
  %s7 = ssub.s32 1, %s5
  %s8 = scalar_select 0, %s7, %s5
  $region1: #{tpu_custom_call.1} parent=0
    #allocation2 [shape = 'u8[4096]{0}', space=vmem, size = 0x1000, scoped, tag = 'output window, operand 0, single buffered']
    #allocation3 [shape = 's32[1]{0}', space=sflag, size = 0x4, scoped, tag = 'scoped memory for tpu_custom_call.1']
    %9 = vsyncpa [#allocation3], 0
    // Predicated region
    $region2: #{tpu_custom_call.1} parent=1 // pred_check
      _
    $region3: #{tpu_custom_call.1} parent=1 // pred_check_branch
      %11 = sbr.rel (0) target = $region5
    $region4: #{tpu_custom_call.1} parent=1 // pred_region
      _
    $region5: #{tpu_custom_call.1} parent=1 // pred_fallthru
      _
    // Predicated region
    $region6: #{tpu_custom_call.1} parent=1 // pred_check
      _
    $region7: #{tpu_custom_call.1} parent=1 // pred_check_branch
      %13 = sbr.rel (0) target = $region9
    $region8: #{tpu_custom_call.1} parent=1 // pred_region
      _
    $region9: #{tpu_custom_call.1} parent=1 // pred_fallthru
      _
    // Predicated region
    $region10: #{tpu_custom_call.1} parent=1 // pred_check
      _
    $region11: #{tpu_custom_call.1} parent=1 // pred_check_branch
      %15 = sbr.rel (0) target = $region13
    $region12: #{tpu_custom_call.1} parent=1 // pred_region
      _
    $region13: #{tpu_custom_call.1} parent=1 // pred_fallthru
      _
    // Predicated region
    $region14: #{tpu_custom_call.1} parent=1 // pred_check
      _
    $region15: #{tpu_custom_call.1} parent=1 // pred_check_branch
      %17 = sbr.rel (0) target = $region17
    $region16: #{tpu_custom_call.1} parent=1 // pred_region
      _
    $region17: #{tpu_custom_call.1} parent=1 // pred_fallthru
      _
    %v19 = vld [vmem:[%s0] sm:$0xff]
    %v20 = vld [vmem:[%s0 + $0x8] sm:$0xff]
    %v21 = vld [vmem:[%s1] sm:$0xf]
    %v22 = vld [vmem:[%s1 + $0x4] sm:$0xf]
    %v23 = vld [vmem:[%s1 + $0x8] sm:$0xf]
    %v24 = vld [vmem:[%s1 + $0xc] sm:$0xf]
    %v25 = vld [vmem:[%s1 + $0x10] sm:$0xf]
    %v26 = vld [vmem:[%s1 + $0x14] sm:$0xf]
    %v27 = vld [vmem:[%s1 + $0x18] sm:$0xf]
    %v28 = vld [vmem:[%s1 + $0x1c] sm:$0xf]
    %v29 = vld [vmem:[%s1 + $0x20] sm:$0xf]
    %v30 = vld [vmem:[%s1 + $0x24] sm:$0xf]
    %v31 = vld [vmem:[%s1 + $0x28] sm:$0xf]
    %v32 = vld [vmem:[%s1 + $0x2c] sm:$0xf]
    %v33 = vld [vmem:[%s1 + $0x30] sm:$0xf]
    %v34 = vld [vmem:[%s1 + $0x34] sm:$0xf]
    %v35 = vld [vmem:[%s1 + $0x38] sm:$0xf]
    %v36 = vld [vmem:[%s1 + $0x3c] sm:$0xf]
    %v37 = vld [vmem:[%s1 + $0x40] sm:$0xf]
    %v38 = vld [vmem:[%s1 + $0x44] sm:$0xf]
    %v39 = vld [vmem:[%s1 + $0x48] sm:$0xf]
    %v40 = vld [vmem:[%s1 + $0x4c] sm:$0xf]
    %v41 = vld [vmem:[%s1 + $0x50] sm:$0xf]
    %v42 = vld [vmem:[%s1 + $0x54] sm:$0xf]
    %v43 = vld [vmem:[%s1 + $0x58] sm:$0xf]
    %v44 = vld [vmem:[%s1 + $0x5c] sm:$0xf]
    %v45 = vld [vmem:[%s1 + $0x60] sm:$0xf]
    %v46 = vld [vmem:[%s1 + $0x64] sm:$0xf]
    %v47 = vld [vmem:[%s1 + $0x68] sm:$0xf]
    %v48 = vld [vmem:[%s1 + $0x6c] sm:$0xf]
    %v49 = vld [vmem:[%s1 + $0x70] sm:$0xf]
    %v50 = vld [vmem:[%s1 + $0x74] sm:$0xf]
    %v51 = vld [vmem:[%s1 + $0x78] sm:$0xf]
    %v52 = vld [vmem:[%s1 + $0x7c] sm:$0xf]
    %v53 = vld [vmem:[%s2] sm:$0x1]
    %v54 = vpack.c.bf16 %v19, %v19
    %v55 = vpack.c.bf16 %v20, %v20
    %v57 = vlaneseq
    %v58 = vshrl.u32 %v57, 7
    %v59 = vsub.s32 0, %v58
    %v60 = vrot.slane %v53, %v59
    %v94 = vunpack.c.l.b16 %v21
    %v95 = vunpack.c.l.b16 %v22
    %v96 = vunpack.c.l.b16 %v23
    %v97 = vunpack.c.l.b16 %v24
    %v98 = vunpack.c.l.b16 %v25
    %v99 = vunpack.c.l.b16 %v26
    %v100 = vunpack.c.l.b16 %v27
    %v101 = vunpack.c.l.b16 %v28
    %v102 = vunpack.c.l.b16 %v29
    %v103 = vunpack.c.l.b16 %v30
    %v104 = vunpack.c.l.b16 %v31
    %v105 = vunpack.c.l.b16 %v32
    %v106 = vunpack.c.l.b16 %v33
    %v107 = vunpack.c.l.b16 %v34
    %v108 = vunpack.c.l.b16 %v35
    %v109 = vunpack.c.l.b16 %v36
    %v110 = vunpack.c.l.b16 %v37
    %v111 = vunpack.c.l.b16 %v38
    %v112 = vunpack.c.l.b16 %v39
    %v113 = vunpack.c.l.b16 %v40
    %v114 = vunpack.c.l.b16 %v41
    %v115 = vunpack.c.l.b16 %v42
    %v116 = vunpack.c.l.b16 %v43
    %v117 = vunpack.c.l.b16 %v44
    %v118 = vunpack.c.l.b16 %v45
    %v119 = vunpack.c.l.b16 %v46
    %v120 = vunpack.c.l.b16 %v47
    %v121 = vunpack.c.l.b16 %v48
    %v122 = vunpack.c.l.b16 %v49
    %v123 = vunpack.c.l.b16 %v50
    %v124 = vunpack.c.l.b16 %v51
    %v125 = vunpack.c.l.b16 %v52
    %v126 = vpack.c.b16 %v95, %v94
    %v127 = vpack.c.b16 %v97, %v96
    %v128 = vpack.c.b16 %v99, %v98
    %v129 = vpack.c.b16 %v101, %v100
    %v130 = vpack.c.b16 %v103, %v102
    %v131 = vpack.c.b16 %v105, %v104
    %v132 = vpack.c.b16 %v107, %v106
    %v133 = vpack.c.b16 %v109, %v108
    %v134 = vpack.c.b16 %v111, %v110
    %v135 = vpack.c.b16 %v113, %v112
    %v136 = vpack.c.b16 %v115, %v114
    %v137 = vpack.c.b16 %v117, %v116
    %v138 = vpack.c.b16 %v119, %v118
    %v139 = vpack.c.b16 %v121, %v120
    %v140 = vpack.c.b16 %v123, %v122
    %v141 = vpack.c.b16 %v125, %v124
    %158 = vmatprep.subr.bf16.mxu0 0
    %159 = vmatpush1.bf16.msra.mxu0 %v133
    %160 = vmatprep.subr.bf16.mxu0 0
    %161 = vmatpush1.bf16.msra.mxu0 %v132
    %162 = vmatprep.subr.bf16.mxu0 0
    %163 = vmatpush1.bf16.msra.mxu0 %v131
    %164 = vmatprep.subr.bf16.mxu0 0
    %165 = vmatpush1.bf16.msra.mxu0 %v130
    %166 = vmatprep.subr.bf16.mxu0 0
    %167 = vmatpush1.bf16.msra.mxu0 %v129
    %168 = vmatprep.subr.bf16.mxu0 0
    %169 = vmatpush1.bf16.msra.mxu0 %v128
    %170 = vmatprep.subr.bf16.mxu0 0
    %171 = vmatpush1.bf16.msra.mxu0 %v127
    %172 = vmatprep.subr.bf16.mxu0 0
    %173 = vmatpush1.bf16.msra.mxu0 %v126
    %174 = vmatprep.subr.bf16.mxu0 0
    %175 = vmatpush2.bf16.msra.mxu0 %v141
    %176 = vmatprep.subr.bf16.mxu0 0
    %177 = vmatpush2.bf16.msra.mxu0 %v140
    %178 = vmatprep.subr.bf16.mxu0 0
    %179 = vmatpush2.bf16.msra.mxu0 %v139
    %180 = vmatprep.subr.bf16.mxu0 0
    %181 = vmatpush2.bf16.msra.mxu0 %v138
    %182 = vmatprep.subr.bf16.mxu0 0
    %183 = vmatpush2.bf16.msra.mxu0 %v137
    %184 = vmatprep.subr.bf16.mxu0 0
    %185 = vmatpush2.bf16.msra.mxu0 %v136
    %186 = vmatprep.subr.bf16.mxu0 0
    %187 = vmatpush2.bf16.msra.mxu0 %v135
    %188 = vmatprep.subr.bf16.mxu0 0
    %189 = vmatpush2.bf16.msra.mxu0 %v134
    %190 = vmatprep.mubr.bf16.mxu0 %v55
    %191 = vmatmul.mubr.bf16.gmra.mxu0 %v54
    %v192 = vpop.f32.mrf.mxu0
    %v193 = vadd.f32 %v60, %v192
    %v194 = vpop.f32.mrf.mxu0
    %v195 = vpop.f32.mrf.mxu0
    %v196 = vpop.f32.mrf.mxu0
    %197 = vdwg.mxu0
    %v198 = vld [vmem:[%s3] sm:$0xff]
    %v199 = vadd.f32 %v193, %v198
    %vm200 = vcmask 261120
    %201 = vst.msk [vmem:[#allocation2] sm:$0xff] %vm200, %v199
    // Predicated region
    $region18: #{tpu_custom_call.1} parent=1 // pred_check
      _
    $region19: #{tpu_custom_call.1} parent=1 // pred_check_branch
      %203 = sbr.rel (0) target = $region21
    $region20: #{tpu_custom_call.1} parent=1 // pred_region
      %s205 = ssub.s32 128, 128
      %206 = vsyncadd [#allocation3], %s205
      %s208 = sshll.u32 [#allocation2], 4
      %s209 = int_to_ptr.vmem [resolvable:$true] %s208
      %211 = dma.vmem_to_hbm [thread:$0]  %s209, 128, %s4, [#allocation3]
    $region21: #{tpu_custom_call.1} parent=1 // pred_fallthru
      _
    // Predicated region
    $region22: #{tpu_custom_call.1} parent=1 // pred_check
      _
    $region23: #{tpu_custom_call.1} parent=1 // pred_check_branch
      %213 = sbr.rel (0) target = $region25
    $region24: #{tpu_custom_call.1} parent=1 // pred_region
      %214 = dma.done [#allocation3], 128
    $region25: #{tpu_custom_call.1} parent=1 // pred_fallthru
      _
    %215 = vsyncpa [#allocation3], 1

</llo_original>
